<compile_context>
chip_gen: v5e
topology: v5e:2x2
jax: 0.10.0
libtpu: 0.0.40
codegen_flags: <defaults>
</compile_context>

<pallas_src>
import functools

import jax
import jax.numpy as jnp
from jax import lax
from jax.experimental import pallas as pl
from jax.experimental.pallas import tpu as pltpu


def _disc_kernel(x_ref, w1_ref, b1_ref, w2_ref, b2_ref, w3_ref, b3_ref, o_ref):
    # Layer 1: (block_b, in) @ (in, hid) -> f32 accumulate on the MXU.
    h1 = jnp.dot(x_ref[...], w1_ref[...], preferred_element_type=jnp.float32)
    h1 = jnp.maximum(h1 + b1_ref[...], 0.0)

    # Layer 2: (block_b, hid) @ (hid, hid).
    h2 = jnp.dot(h1.astype(w2_ref.dtype), w2_ref[...],
                 preferred_element_type=jnp.float32)
    h2 = jnp.maximum(h2 + b2_ref[...], 0.0)

    # Layer 3: contract hid of w3 row (1, hid) with hid of h2 (block_b, hid)
    # -> (1, block_b). Result is already lane-dense, so the store below is an
    # unmasked full-lane vst (no (block_b, 1) masked column store).
    z = lax.dot_general(
        w3_ref[...], h2.astype(w3_ref.dtype),
        dimension_numbers=(((1,), (1,)), ((), ())),
        preferred_element_type=jnp.float32)
    z = z + b3_ref[...]                      # (1, 1) broadcasts over lanes
    o_ref[0] = jax.nn.sigmoid(z).astype(o_ref.dtype)


@functools.partial(jax.jit, static_argnames=("block_b", "compute_dtype"))
def discriminator_forward(x, params, block_b=512, compute_dtype=jnp.bfloat16):
    """x: (B, input_size). params: dict with w1t,b1,w2t,b2,w3t,b3 (weights pre-transposed to (in, out)).

    block_b: batch rows per grid step (multiple of 8; sweep 256-1024 for large B).
    compute_dtype: matmul operand dtype (bf16 on v6e/v7x; f32 also supported, e.g. for v5e tests).
    """
    B, in_size = x.shape
    hid = params["w1t"].shape[1]
    cd = jnp.dtype(compute_dtype)

    # Operands for the MXU in compute dtype; biases / elementwise math stay f32.
    xc = x.astype(cd)
    w1t = params["w1t"].astype(cd)
    w2t = params["w2t"].astype(cd)
    w3row = params["w3t"].reshape(hid, 1).T.astype(cd)          # (1, hid) row form
    b1 = params["b1"].reshape(1, hid).astype(jnp.float32)
    b2 = params["b2"].reshape(1, hid).astype(jnp.float32)
    b3 = params["b3"].reshape(1, 1).astype(jnp.float32)

    # Effective batch tile: whole batch if it fits in one tile, otherwise block_b (mult. of 8).
    if B <= block_b:
        bb = B
    else:
        assert block_b % 8 == 0, "block_b must be a multiple of 8"
        bb = block_b
    num_tiles = pl.cdiv(B, bb)

    # Zero-pad the batch so the final tile never reads undefined HBM (cheap; sliced off below).
    if num_tiles * bb != B:
        xc = jnp.pad(xc, ((0, num_tiles * bb - B), (0, 0)))

    full = lambda i: (0, 0)  # weights/biases: constant index map -> block stays resident

    out3d = pl.pallas_call(
        _disc_kernel,
        out_shape=jax.ShapeDtypeStruct((num_tiles, 1, bb), x.dtype),
        grid=(num_tiles,),
        in_specs=[
            pl.BlockSpec((bb, in_size), lambda i: (i, 0)),   # x tile over batch
            pl.BlockSpec((in_size, hid), full),              # w1 (in, hid)
            pl.BlockSpec((1, hid), full),                    # b1
            pl.BlockSpec((hid, hid), full),                  # w2
            pl.BlockSpec((1, hid), full),                    # b2
            pl.BlockSpec((1, hid), full),                    # w3 as a row
            pl.BlockSpec((1, 1), full),                      # b3
        ],
        out_specs=pl.BlockSpec((1, 1, bb), lambda i: (i, 0, 0)),  # lane-dense row per step
        compiler_params=pltpu.CompilerParams(dimension_semantics=("parallel",)),
    )(xc, w1t, b1, w2t, b2, w3row, b3)

    # (num_tiles, 1, bb) -> (B, 1); padded rows of a partial final tile are sliced off.
    return out3d.reshape(num_tiles * bb)[:B].reshape(B, 1)


def init_params(key, input_size, hid_size):
    """Deterministic init mimicking nn.Linear's U(-1/sqrt(fan_in), 1/sqrt(fan_in))."""
    ks = jax.random.split(key, 6)

    def lin(kw, kb, fan_in, fan_out):
        bound = 1.0 / jnp.sqrt(fan_in)
        w = jax.random.uniform(kw, (fan_out, fan_in), jnp.float32, -bound, bound)
        b = jax.random.uniform(kb, (fan_out,), jnp.float32, -bound, bound)
        return w, b

    w1, b1 = lin(ks[0], ks[1], input_size, hid_size)
    w2, b2 = lin(ks[2], ks[3], hid_size, hid_size)
    w3, b3 = lin(ks[4], ks[5], hid_size, 1)
    # store transposed weights so the kernel does x @ W (shape (in, out))
    return {"w1t": w1.T, "b1": b1, "w2t": w2.T, "b2": b2, "w3t": w3.T, "b3": b3}


def reference_forward_f32(x, params):
    h1 = jnp.maximum(x @ params["w1t"] + params["b1"], 0.0)
    h2 = jnp.maximum(h1 @ params["w2t"] + params["b2"], 0.0)
    return jax.nn.sigmoid(h2 @ params["w3t"] + params["b3"])


def reference_forward_quantized(x, params, compute_dtype=jnp.bfloat16):
    """Same math as the kernel: matmul operands rounded to compute_dtype, f32 accumulation."""
    q = lambda a: a.astype(compute_dtype).astype(jnp.float32)
    h1 = jnp.maximum(q(x) @ q(params["w1t"]) + params["b1"], 0.0)
    h2 = jnp.maximum(q(h1) @ q(params["w2t"]) + params["b2"], 0.0)
    return jax.nn.sigmoid(q(h2) @ q(params["w3t"]) + params["b3"])


if __name__ == "__main__":
    key = jax.random.PRNGKey(0)
    kx, kp = jax.random.split(key)

    batch, input_size, hid_size = 16, 16, 32
    x = jax.random.normal(kx, (batch, input_size), jnp.float32)
    params = init_params(kp, input_size, hid_size)

    # Multi-step grid path (small block just to exercise tiling; production default is 512).
    out_tiled = jax.block_until_ready(discriminator_forward(x, params, block_b=8))
    # Single-tile path (B <= default block_b).
    out_full = jax.block_until_ready(discriminator_forward(x, params))

    assert out_tiled.shape == (batch, 1)
    assert out_full.shape == (batch, 1)

    ref_q = reference_forward_quantized(x, params)     # matches kernel's bf16-operand math
    ref_f = reference_forward_f32(x, params)           # pure f32 sanity check

    assert jnp.allclose(out_tiled, ref_q, atol=3e-5, rtol=3e-5)
    assert jnp.allclose(out_full, ref_q, atol=3e-5, rtol=3e-5)
    assert jnp.allclose(out_tiled, ref_f, atol=2e-2, rtol=2e-2)

    print("KERNEL_OK")
</pallas_src>

<mosaic_0001>
module attributes {stable_mosaic.version = 11 : i64} {
  func.func @_disc_kernel(%arg0: i32, %arg1: memref<8x16xbf16, #tpu.memory_space<vmem>>, %arg2: memref<16x32xbf16, #tpu.memory_space<vmem>>, %arg3: memref<1x32xf32, #tpu.memory_space<vmem>>, %arg4: memref<32x32xbf16, #tpu.memory_space<vmem>>, %arg5: memref<1x32xf32, #tpu.memory_space<vmem>>, %arg6: memref<1x32xbf16, #tpu.memory_space<vmem>>, %arg7: memref<1x1xf32, #tpu.memory_space<vmem>>, %arg8: memref<1x1x8xf32, #tpu.memory_space<vmem>>) attributes {dimension_semantics = [#tpu.dimension_semantics<parallel>], iteration_bounds = array<i64: 2>, scalar_prefetch = 0 : i64, scratch_operands = 0 : i64, tpu.core_type = #tpu.core_type<tc>, window_params = [{transform_indices = @transform_0, window_bounds = array<i64: 8, 16>}, {pipeline_mode = #tpu.pipeline_mode<synchronous>, transform_indices = @transform_1, window_bounds = array<i64: 16, 32>}, {pipeline_mode = #tpu.pipeline_mode<synchronous>, transform_indices = @transform_2, window_bounds = array<i64: 1, 32>}, {pipeline_mode = #tpu.pipeline_mode<synchronous>, transform_indices = @transform_3, window_bounds = array<i64: 32, 32>}, {pipeline_mode = #tpu.pipeline_mode<synchronous>, transform_indices = @transform_4, window_bounds = array<i64: 1, 32>}, {pipeline_mode = #tpu.pipeline_mode<synchronous>, transform_indices = @transform_5, window_bounds = array<i64: 1, 32>}, {pipeline_mode = #tpu.pipeline_mode<synchronous>, transform_indices = @transform_6, window_bounds = array<i64: 1, 1>}, {transform_indices = @transform_7, window_bounds = array<i64: 1, 1, 8>}]} {
    %c0 = arith.constant 0 : index
    %c0_0 = arith.constant 0 : index
    %0 = vector.load %arg1[%c0, %c0_0] : memref<8x16xbf16, #tpu.memory_space<vmem>>, vector<8x16xbf16>
    %c0_1 = arith.constant 0 : index
    %c0_2 = arith.constant 0 : index
    %1 = vector.load %arg2[%c0_1, %c0_2] : memref<16x32xbf16, #tpu.memory_space<vmem>>, vector<16x32xbf16>
    %cst = arith.constant dense<0.000000e+00> : vector<8x32xf32>
    %2 = tpu.matmul %0, %1, %cst {dimension_numbers = #tpu.dot_dimension_numbers<[1], [0], [0], [1], [0, 0, 1, 1], [], []>} : vector<8x16xbf16>, vector<16x32xbf16>, vector<8x32xf32> -> vector<8x32xf32>
    %c0_3 = arith.constant 0 : index
    %c0_4 = arith.constant 0 : index
    %3 = vector.load %arg3[%c0_3, %c0_4] : memref<1x32xf32, #tpu.memory_space<vmem>>, vector<1x32xf32>
    %4 = vector.broadcast %3 : vector<1x32xf32> to vector<8x32xf32>
    %5 = arith.addf %2, %4 : vector<8x32xf32>
    %cst_5 = arith.constant 0.000000e+00 : f32
    %6 = vector.broadcast %cst_5 : f32 to vector<8x32xf32>
    %7 = arith.maximumf %5, %6 : vector<8x32xf32>
    %8 = arith.truncf %7 : vector<8x32xf32> to vector<8x32xbf16>
    %c0_6 = arith.constant 0 : index
    %c0_7 = arith.constant 0 : index
    %9 = vector.load %arg4[%c0_6, %c0_7] : memref<32x32xbf16, #tpu.memory_space<vmem>>, vector<32x32xbf16>
    %cst_8 = arith.constant dense<0.000000e+00> : vector<8x32xf32>
    %10 = tpu.matmul %8, %9, %cst_8 {dimension_numbers = #tpu.dot_dimension_numbers<[1], [0], [0], [1], [0, 0, 1, 1], [], []>} : vector<8x32xbf16>, vector<32x32xbf16>, vector<8x32xf32> -> vector<8x32xf32>
    %c0_9 = arith.constant 0 : index
    %c0_10 = arith.constant 0 : index
    %11 = vector.load %arg5[%c0_9, %c0_10] : memref<1x32xf32, #tpu.memory_space<vmem>>, vector<1x32xf32>
    %12 = vector.broadcast %11 : vector<1x32xf32> to vector<8x32xf32>
    %13 = arith.addf %10, %12 : vector<8x32xf32>
    %cst_11 = arith.constant 0.000000e+00 : f32
    %14 = vector.broadcast %cst_11 : f32 to vector<8x32xf32>
    %15 = arith.maximumf %13, %14 : vector<8x32xf32>
    %c0_12 = arith.constant 0 : index
    %c0_13 = arith.constant 0 : index
    %16 = vector.load %arg6[%c0_12, %c0_13] : memref<1x32xbf16, #tpu.memory_space<vmem>>, vector<1x32xbf16>
    %17 = arith.truncf %15 : vector<8x32xf32> to vector<8x32xbf16>
    %cst_14 = arith.constant dense<0.000000e+00> : vector<1x8xf32>
    %18 = tpu.matmul %16, %17, %cst_14 {dimension_numbers = #tpu.dot_dimension_numbers<[1], [1], [0], [0], [0, 0, 1, 0], [], []>} : vector<1x32xbf16>, vector<8x32xbf16>, vector<1x8xf32> -> vector<1x8xf32>
    %c0_15 = arith.constant 0 : index
    %c0_16 = arith.constant 0 : index
    %19 = vector.load %arg7[%c0_15, %c0_16] : memref<1x1xf32, #tpu.memory_space<vmem>>, vector<1x1xf32>
    %20 = vector.broadcast %19 : vector<1x1xf32> to vector<1x8xf32>
    %21 = arith.addf %18, %20 : vector<1x8xf32>
    %22 = arith.negf %21 : vector<1x8xf32>
    %23 = math.exp %22 : vector<1x8xf32>
    %cst_17 = arith.constant 1.000000e+00 : f32
    %24 = vector.broadcast %cst_17 : f32 to vector<1x8xf32>
    %25 = arith.addf %24, %23 : vector<1x8xf32>
    %26 = arith.divf %24, %25 : vector<1x8xf32>
    %c0_18 = arith.constant 0 : index
    %c0_19 = arith.constant 0 : index
    %c0_20 = arith.constant 0 : index
    %27 = vector.load %arg8[%c0_18, %c0_19, %c0_20] : memref<1x1x8xf32, #tpu.memory_space<vmem>>, vector<1x1x8xf32>
    %28 = vector.shape_cast %27 : vector<1x1x8xf32> to vector<1x8xf32>
    %29 = vector.shape_cast %26 : vector<1x8xf32> to vector<1x1x8xf32>
    tpu.vector_store %arg8[%c0_18, %c0_19, %c0_20], %29 {strides = array<i32>} : memref<1x1x8xf32, #tpu.memory_space<vmem>>, vector<1x1x8xf32>,
    return
  }
  func.func @transform_0(%arg0: i32) -> (i32, i32) {
    %c0_i32 = arith.constant 0 : i32
    %c0_i32_0 = arith.constant 0 : i32
    return %arg0, %c0_i32 : i32, i32
  }
  func.func @transform_1(%arg0: i32) -> (i32, i32) {
    %c0_i32 = arith.constant 0 : i32
    %c0_i32_0 = arith.constant 0 : i32
    %c0_i32_1 = arith.constant 0 : i32
    return %c0_i32, %c0_i32_0 : i32, i32
  }
  func.func @transform_2(%arg0: i32) -> (i32, i32) {
    %c0_i32 = arith.constant 0 : i32
    %c0_i32_0 = arith.constant 0 : i32
    %c0_i32_1 = arith.constant 0 : i32
    return %c0_i32, %c0_i32_0 : i32, i32
  }
  func.func @transform_3(%arg0: i32) -> (i32, i32) {
    %c0_i32 = arith.constant 0 : i32
    %c0_i32_0 = arith.constant 0 : i32
    %c0_i32_1 = arith.constant 0 : i32
    return %c0_i32, %c0_i32_0 : i32, i32
  }
  func.func @transform_4(%arg0: i32) -> (i32, i32) {
    %c0_i32 = arith.constant 0 : i32
    %c0_i32_0 = arith.constant 0 : i32
    %c0_i32_1 = arith.constant 0 : i32
    return %c0_i32, %c0_i32_0 : i32, i32
  }
  func.func @transform_5(%arg0: i32) -> (i32, i32) {
    %c0_i32 = arith.constant 0 : i32
    %c0_i32_0 = arith.constant 0 : i32
    %c0_i32_1 = arith.constant 0 : i32
    return %c0_i32, %c0_i32_0 : i32, i32
  }
  func.func @transform_6(%arg0: i32) -> (i32, i32) {
    %c0_i32 = arith.constant 0 : i32
    %c0_i32_0 = arith.constant 0 : i32
    %c0_i32_1 = arith.constant 0 : i32
    return %c0_i32, %c0_i32_0 : i32, i32
  }
  func.func @transform_7(%arg0: i32) -> (i32, i32, i32) {
    %c0_i32 = arith.constant 0 : i32
    %c0_i32_0 = arith.constant 0 : i32
    %c0_i32_1 = arith.constant 0 : i32
    return %arg0, %c0_i32, %c0_i32_0 : i32, i32, i32
  }
}

</mosaic_0001>

<llo_original>
// kernel: discriminator_forward.1
$region0: #{discriminator_forward.1}
  #allocation0 [shape = 'u32[]', space=smem, size = 0x4, offset = 0x4, fixed_abs, tag = 'smem constant byte address 0x4 - core index']
  #allocation1 [shape = 'u32[72,128]{1,0:T(1,128)}', space=vmem, size = 0x9000, scoped, tag = 'internal scratch']
  #allocation2 [shape = 'f32[1,1]{1,0:T(1,128)S(1)}', space=vmem, size = 0x200, scoped, tag = 'scoped memory for discriminator_forward.1']
  %s0 = inlined_call_operand.vmem [shape: bf16[16,16], index: 0, kind: input, shape index: {}]
  %s1 = inlined_call_operand.vmem [shape: bf16[16,32], index: 1, kind: input, shape index: {}]
  %s2 = inlined_call_operand.vmem [shape: f32[1,32], index: 2, kind: input, shape index: {}]
  %s3 = inlined_call_operand.vmem [shape: bf16[32,32], index: 3, kind: input, shape index: {}]
  %s4 = inlined_call_operand.vmem [shape: f32[1,32], index: 4, kind: input, shape index: {}]
  %s5 = inlined_call_operand.vmem [shape: bf16[1,32], index: 5, kind: input, shape index: {}]
  %s6 = inlined_call_operand.<no memory space> [shape: f32[1,1], index: 6, kind: input, shape index: {}]
  %s7 = inlined_call_operand.vmem [shape: f32[2,1,8], index: 7, kind: output, shape index: {}]
  %s8 = sld [smem:[#allocation0]]
  $region61: #{discriminator_forward.1} parent=0
    _
  %s10 = ssub.s32 1, %s8
  %s11 = scalar_select 0, %s10, %s8
  %v12 = vstv %s6
  %13 = vst [vmem:[#allocation2] sm:$0x1] %v12
  loop: start=0, step=1, limit=4
  $region2: #{discriminator_forward.1} parent=0 // loop_pre_header
    _
  $region3: #{discriminator_forward.1} parent=0 // loop_header
    %s15 = sphi 0, %s19
    %p16 = scmp.ge.s32.totalorder %s15, 4
    %s25 = sphi 0, %s27
    %s28 = sphi 0, %s25
    %s29 = sphi 0, %s28
    %s45 = sphi 0, %s29
    %s49 = sphi 0, %s49
    %s51 = sphi 0, %s49
    %s52 = sphi 0, %s51
    %s66 = sphi 0, %s52
    %s70 = sphi 0, %s70
    %s72 = sphi 0, %s70
    %s73 = sphi 0, %s72
    %s87 = sphi 0, %s73
    %s91 = sphi 0, %s91
    %s93 = sphi 0, %s91
    %s94 = sphi 0, %s93
    %s108 = sphi 0, %s94
    %s112 = sphi 0, %s112
    %s114 = sphi 0, %s112
    %s115 = sphi 0, %s114
    %s129 = sphi 0, %s115
    %s133 = sphi 0, %s133
    %s135 = sphi 0, %s133
    %s136 = sphi 0, %s135
    %s150 = sphi 0, %s136
    %s154 = sphi 0, %s154
    %s156 = sphi 0, %s154
    %s157 = sphi 0, %s156
    %s171 = sphi 0, %s157
    %s177 = sphi 0, %s179
    %s180 = sphi 0, %s177
    %s181 = sphi 0, %s180
    %s197 = sphi 0, %s181
  $region4: #{discriminator_forward.1} parent=0 // loop_header_branch
    %18 = sbr.rel (%p16) target = $region8
  $region5: #{discriminator_forward.1} parent=0 // loop_body
    %s20 = ssub.s32 %s15, 1
    %s21 = ssub.s32 %s15, 2
    %s22 = sadd.s32 %s15, 1
    %s23 = ssub.s32 %s15, %s22
    %p24 = scmp.eq.s32.totalorder %s23, 0
    %s26 = sadd.s32 %s25, 1
    %s27 = scalar_select %p24, %s25, %s26
    %p30 = pneg %p24
    %p31 = scmp.eq.s32.totalorder %s15, 1
    %p32 = por %p30, %p31
    %p33 = scmp.ne.s32.totalorder %s25, %s28
    %p34 = scmp.eq.s32.totalorder %s15, 0
    %p35 = por %p33, %p34
    %p36 = scmp.ne.s32.totalorder %s25, %s28
    %p37 = scmp.eq.s32.totalorder %s20, 1
    %p38 = por %p36, %p37
    %p39 = scmp.ne.s32.totalorder %s28, %s29
    %p40 = scmp.eq.s32.totalorder %s20, 0
    %p41 = por %p39, %p40
    %p42 = scmp.ne.s32.totalorder %s28, %s29
    %p43 = scmp.eq.s32.totalorder %s21, 1
    %p44 = por %p42, %p43
    %p46 = scmp.ne.s32.totalorder %s29, %s45
    %p47 = scmp.eq.s32.totalorder %s21, 0
    %p48 = por %p46, %p47
    %s50 = sadd.s32 %s49, 1
    %p53 = scmp.eq.s32.totalorder %s15, 1
    %p54 = scmp.ne.s32.totalorder %s49, %s51
    %p55 = scmp.eq.s32.totalorder %s15, 0
    %p56 = por %p54, %p55
    %p57 = scmp.ne.s32.totalorder %s49, %s51
    %p58 = scmp.eq.s32.totalorder %s20, 1
    %p59 = por %p57, %p58
    %p60 = scmp.ne.s32.totalorder %s51, %s52
    %p61 = scmp.eq.s32.totalorder %s20, 0
    %p62 = por %p60, %p61
    %p63 = scmp.ne.s32.totalorder %s51, %s52
    %p64 = scmp.eq.s32.totalorder %s21, 1
    %p65 = por %p63, %p64
    %p67 = scmp.ne.s32.totalorder %s52, %s66
    %p68 = scmp.eq.s32.totalorder %s21, 0
    %p69 = por %p67, %p68
    %s71 = sadd.s32 %s70, 1
    %p74 = scmp.eq.s32.totalorder %s15, 1
    %p75 = scmp.ne.s32.totalorder %s70, %s72
    %p76 = scmp.eq.s32.totalorder %s15, 0
    %p77 = por %p75, %p76
    %p78 = scmp.ne.s32.totalorder %s70, %s72
    %p79 = scmp.eq.s32.totalorder %s20, 1
    %p80 = por %p78, %p79
    %p81 = scmp.ne.s32.totalorder %s72, %s73
    %p82 = scmp.eq.s32.totalorder %s20, 0
    %p83 = por %p81, %p82
    %p84 = scmp.ne.s32.totalorder %s72, %s73
    %p85 = scmp.eq.s32.totalorder %s21, 1
    %p86 = por %p84, %p85
    %p88 = scmp.ne.s32.totalorder %s73, %s87
    %p89 = scmp.eq.s32.totalorder %s21, 0
    %p90 = por %p88, %p89
    %s92 = sadd.s32 %s91, 1
    %p95 = scmp.eq.s32.totalorder %s15, 1
    %p96 = scmp.ne.s32.totalorder %s91, %s93
    %p97 = scmp.eq.s32.totalorder %s15, 0
    %p98 = por %p96, %p97
    %p99 = scmp.ne.s32.totalorder %s91, %s93
    %p100 = scmp.eq.s32.totalorder %s20, 1
    %p101 = por %p99, %p100
    %p102 = scmp.ne.s32.totalorder %s93, %s94
    %p103 = scmp.eq.s32.totalorder %s20, 0
    %p104 = por %p102, %p103
    %p105 = scmp.ne.s32.totalorder %s93, %s94
    %p106 = scmp.eq.s32.totalorder %s21, 1
    %p107 = por %p105, %p106
    %p109 = scmp.ne.s32.totalorder %s94, %s108
    %p110 = scmp.eq.s32.totalorder %s21, 0
    %p111 = por %p109, %p110
    %s113 = sadd.s32 %s112, 1
    %p116 = scmp.eq.s32.totalorder %s15, 1
    %p117 = scmp.ne.s32.totalorder %s112, %s114
    %p118 = scmp.eq.s32.totalorder %s15, 0
    %p119 = por %p117, %p118
    %p120 = scmp.ne.s32.totalorder %s112, %s114
    %p121 = scmp.eq.s32.totalorder %s20, 1
    %p122 = por %p120, %p121
    %p123 = scmp.ne.s32.totalorder %s114, %s115
    %p124 = scmp.eq.s32.totalorder %s20, 0
    %p125 = por %p123, %p124
    %p126 = scmp.ne.s32.totalorder %s114, %s115
    %p127 = scmp.eq.s32.totalorder %s21, 1
    %p128 = por %p126, %p127
    %p130 = scmp.ne.s32.totalorder %s115, %s129
    %p131 = scmp.eq.s32.totalorder %s21, 0
    %p132 = por %p130, %p131
    %s134 = sadd.s32 %s133, 1
    %p137 = scmp.eq.s32.totalorder %s15, 1
    %p138 = scmp.ne.s32.totalorder %s133, %s135
    %p139 = scmp.eq.s32.totalorder %s15, 0
    %p140 = por %p138, %p139
    %p141 = scmp.ne.s32.totalorder %s133, %s135
    %p142 = scmp.eq.s32.totalorder %s20, 1
    %p143 = por %p141, %p142
    %p144 = scmp.ne.s32.totalorder %s135, %s136
    %p145 = scmp.eq.s32.totalorder %s20, 0
    %p146 = por %p144, %p145
    %p147 = scmp.ne.s32.totalorder %s135, %s136
    %p148 = scmp.eq.s32.totalorder %s21, 1
    %p149 = por %p147, %p148
    %p151 = scmp.ne.s32.totalorder %s136, %s150
    %p152 = scmp.eq.s32.totalorder %s21, 0
    %p153 = por %p151, %p152
    %s155 = sadd.s32 %s154, 1
    %p158 = scmp.eq.s32.totalorder %s15, 1
    %p159 = scmp.ne.s32.totalorder %s154, %s156
    %p160 = scmp.eq.s32.totalorder %s15, 0
    %p161 = por %p159, %p160
    %p162 = scmp.ne.s32.totalorder %s154, %s156
    %p163 = scmp.eq.s32.totalorder %s20, 1
    %p164 = por %p162, %p163
    %p165 = scmp.ne.s32.totalorder %s156, %s157
    %p166 = scmp.eq.s32.totalorder %s20, 0
    %p167 = por %p165, %p166
    %p168 = scmp.ne.s32.totalorder %s156, %s157
    %p169 = scmp.eq.s32.totalorder %s21, 1
    %p170 = por %p168, %p169
    %p172 = scmp.ne.s32.totalorder %s157, %s171
    %p173 = scmp.eq.s32.totalorder %s21, 0
    %p174 = por %p172, %p173
    %s175 = ssub.s32 %s15, %s22
    %p176 = scmp.eq.s32.totalorder %s175, 0
    %s178 = sadd.s32 %s177, 1
    %s179 = scalar_select %p176, %s177, %s178
    %p182 = pneg %p176
    %p183 = scmp.eq.s32.totalorder %s15, 1
    %p184 = por %p182, %p183
    %p185 = scmp.ne.s32.totalorder %s177, %s180
    %p186 = scmp.eq.s32.totalorder %s15, 0
    %p187 = por %p185, %p186
    %p188 = scmp.ne.s32.totalorder %s177, %s180
    %p189 = scmp.eq.s32.totalorder %s20, 1
    %p190 = por %p188, %p189
    %p191 = scmp.ne.s32.totalorder %s180, %s181
    %p192 = scmp.eq.s32.totalorder %s20, 0
    %p193 = por %p191, %p192
    %p194 = scmp.ne.s32.totalorder %s180, %s181
    %p195 = scmp.eq.s32.totalorder %s21, 1
    %p196 = por %p194, %p195
    %p198 = scmp.ne.s32.totalorder %s181, %s197
    %p199 = scmp.eq.s32.totalorder %s21, 0
    %p200 = por %p198, %p199
    %p201 = scmp.le.s32.totalorder 1, %s15
    %p202 = scmp.lt.s32.totalorder %s15, 3
    %p203 = pnand %p201, %p202
    %p204 = pneg %p203
    // Predicated region
    $region9: #{discriminator_forward.1} parent=5 // pred_check
      _
    $region10: #{discriminator_forward.1} parent=5 // pred_check_branch
      %206 = sbr.rel (%p203) target = $region12
    $region11: #{discriminator_forward.1} parent=5 // pred_region
      %s207 = ssub.s32 %s15, 1
      // Predicated region
      $region13: #{discriminator_forward.1} parent=11 // pred_check
        %p208 = pneg %p62
      $region14: #{discriminator_forward.1} parent=11 // pred_check_branch
        %210 = sbr.rel (%p208) target = $region16
      $region15: #{discriminator_forward.1} parent=11 // pred_region
        _
      $region16: #{discriminator_forward.1} parent=11 // pred_fallthru
        _
      // Predicated region
      $region17: #{discriminator_forward.1} parent=11 // pred_check
        %p211 = pneg %p83
      $region18: #{discriminator_forward.1} parent=11 // pred_check_branch
        %213 = sbr.rel (%p211) target = $region20
      $region19: #{discriminator_forward.1} parent=11 // pred_region
        _
      $region20: #{discriminator_forward.1} parent=11 // pred_fallthru
        _
      // Predicated region
      $region21: #{discriminator_forward.1} parent=11 // pred_check
        %p214 = pneg %p104
      $region22: #{discriminator_forward.1} parent=11 // pred_check_branch
        %216 = sbr.rel (%p214) target = $region24
      $region23: #{discriminator_forward.1} parent=11 // pred_region
        _
      $region24: #{discriminator_forward.1} parent=11 // pred_fallthru
        _
      // Predicated region
      $region25: #{discriminator_forward.1} parent=11 // pred_check
        %p217 = pneg %p125
      $region26: #{discriminator_forward.1} parent=11 // pred_check_branch
        %219 = sbr.rel (%p217) target = $region28
      $region27: #{discriminator_forward.1} parent=11 // pred_region
        _
      $region28: #{discriminator_forward.1} parent=11 // pred_fallthru
        _
      // Predicated region
      $region29: #{discriminator_forward.1} parent=11 // pred_check
        %p220 = pneg %p146
      $region30: #{discriminator_forward.1} parent=11 // pred_check_branch
        %222 = sbr.rel (%p220) target = $region32
      $region31: #{discriminator_forward.1} parent=11 // pred_region
        _
      $region32: #{discriminator_forward.1} parent=11 // pred_fallthru
        _
      // Predicated region
      $region33: #{discriminator_forward.1} parent=11 // pred_check
        %p223 = pneg %p167
      $region34: #{discriminator_forward.1} parent=11 // pred_check_branch
        %225 = sbr.rel (%p223) target = $region36
      $region35: #{discriminator_forward.1} parent=11 // pred_region
        _
      $region36: #{discriminator_forward.1} parent=11 // pred_fallthru
        _
    $region12: #{discriminator_forward.1} parent=5 // pred_fallthru
      _
    %p226 = scmp.lt.s32.totalorder %s15, 2
    // Predicated region
    $region37: #{discriminator_forward.1} parent=5 // pred_check
      %p227 = pneg %p226
    $region38: #{discriminator_forward.1} parent=5 // pred_check_branch
      %229 = sbr.rel (%p227) target = $region40
    $region39: #{discriminator_forward.1} parent=5 // pred_region
      // Predicated region
      $region41: #{discriminator_forward.1} parent=39 // pred_check
        %p230 = pneg %p35
      $region42: #{discriminator_forward.1} parent=39 // pred_check_branch
        %232 = sbr.rel (%p230) target = $region44
      $region43: #{discriminator_forward.1} parent=39 // pred_region
        %p233 = scmp.lt.s32.totalorder %s15, 1
        %s234 = scalar_select %p233, %s15, 1
        %s235 = smul.addr %s234, 4
        %s236 = scalar_lea.vmem %s0, %s235
      $region44: #{discriminator_forward.1} parent=39 // pred_fallthru
        _
    $region40: #{discriminator_forward.1} parent=5 // pred_fallthru
      _
    %p237 = scmp.le.s32.totalorder 1, %s15
    %p238 = scmp.lt.s32.totalorder %s15, 3
    %p239 = pnand %p237, %p238
    %p240 = pneg %p239
    // Predicated region
    $region45: #{discriminator_forward.1} parent=5 // pred_check
      _
    $region46: #{discriminator_forward.1} parent=5 // pred_check_branch
      %242 = sbr.rel (%p239) target = $region48
    $region47: #{discriminator_forward.1} parent=5 // pred_region
      %s243 = ssub.s32 %s15, 1
      %p244 = scmp.lt.s32.totalorder %s20, 1
      %s245 = scalar_select %p244, %s20, 1
      %s246 = smul.addr %s245, 4
      %s247 = scalar_lea.vmem %s0, %s246
      %p248 = pneg %p41
      %p249 = pneg %p38
      %p250 = pneg %p62
      %p251 = pneg %p59
      %p252 = pneg %p83
      %p253 = pneg %p80
      %p254 = pneg %p104
      %p255 = pneg %p101
      %p256 = pneg %p125
      %p257 = pneg %p122
      %p258 = pneg %p146
      %p259 = pneg %p143
      %p260 = pneg %p167
      %p261 = pneg %p164
      %p262 = pneg %p193
      %p263 = pneg %p190
      %p264 = scmp.lt.s32.totalorder %s20, 1
      %s265 = scalar_select %p264, %s20, 1
      %s266 = scalar_lea.vmem %s7, %s265
      %p267 = scmp.lt.s32.totalorder %s20, 1
      %s268 = scalar_select %p267, %s20, 1
      %s269 = smul.addr %s268, 4
      %s270 = scalar_lea.vmem %s0, %s269
      %p271 = scmp.lt.s32.totalorder %s20, 1
      %s272 = scalar_select %p271, %s20, 1
      %s273 = scalar_lea.vmem %s7, %s272
      %v275 = vld [vmem:[%s270] sm:$0xf]
      %v276 = vld [vmem:[%s1] sm:$0xf]
      %v277 = vld [vmem:[%s1 + $0x4] sm:$0xf]
      %v278 = vld [vmem:[%s2] sm:$0x1]
      %v280 = vperm.slane %v278, 0
      %v284 = vunpack.c.l.b16 %v276
      %v285 = vunpack.c.l.b16 %v277
      %v286 = vpack.c.b16 %v285, %v284
      %vm288 = vcmask 130048
      %v290 = vsel %vm288, %v275, 0
      %292 = vmatpush.bf16.msra.mxu0 0
      %293 = vmatpush.bf16.msra.mxu0 0
      %294 = vmatpush.bf16.msra.mxu0 0
      %295 = vmatpush.bf16.msra.mxu0 0
      %296 = vmatpush.bf16.msra.mxu0 0
      %297 = vmatpush.bf16.msra.mxu0 0
      %298 = vmatpush.bf16.msra.mxu0 0
      %299 = vmatpush.bf16.msra.mxu0 %v286
      %300 = vmatmul.bf16.gmra.mxu0 %v290
      %v301 = vpop.f32.mrf.mxu0
      %v302 = vadd.f32 %v280, %v301
      %v303 = vpop.f32.mrf.mxu0
      %304 = vdwg.mxu0
      %v305 = vmax.f32 %v302, 0.0
      %v306 = vpack.c.bf16 %v305, %v305
      %v307 = vld [vmem:[%s3] sm:$0xf]
      %v308 = vld [vmem:[%s3 + $0x4] sm:$0xf]
      %v309 = vld [vmem:[%s3 + $0x8] sm:$0xf]
      %v310 = vld [vmem:[%s3 + $0xc] sm:$0xf]
      %v311 = vld [vmem:[%s4] sm:$0x1]
      %v313 = vperm.slane %v311, 0
      %v319 = vunpack.c.l.b16 %v307
      %v320 = vunpack.c.l.b16 %v308
      %v321 = vunpack.c.l.b16 %v309
      %v322 = vunpack.c.l.b16 %v310
      %v323 = vpack.c.b16 %v320, %v319
      %v324 = vpack.c.b16 %v322, %v321
      %vm327 = vcmask 261120
      %v329 = vsel %vm327, %v306, 0
      %331 = vmatpush.bf16.msra.mxu0 0
      %332 = vmatpush.bf16.msra.mxu0 0
      %333 = vmatpush.bf16.msra.mxu0 0
      %334 = vmatpush.bf16.msra.mxu0 0
      %335 = vmatpush.bf16.msra.mxu0 0
      %336 = vmatpush.bf16.msra.mxu0 0
      %337 = vmatpush.bf16.msra.mxu0 %v324
      %338 = vmatpush.bf16.msra.mxu0 %v323
      %339 = vmatmul.bf16.gmra.mxu0 %v329
      %v340 = vpop.f32.mrf.mxu0
      %v341 = vadd.f32 %v313, %v340
      %v342 = vpop.f32.mrf.mxu0
      %343 = vdwg.mxu0
      %v344 = vmax.f32 %v341, 0.0
      %v345 = vld [vmem:[%s5] sm:$0x1]
      %v346 = vpack.c.bf16 %v344, %v344
      %v347 = vld [vmem:[#allocation2] sm:$0x1]
      %349 = vset.pattern.permute.xlu0 0
      %350 = vperm.xlu0 %349, %v347
      %v351 = vpop.permute.xlu0 %350
      %v353 = vperm.slane %v351, 0
      %v355 = vsel %vm327, %v345, 0
      %v358 = vsel %vm327, %v346, 0
      %360 = vmatpush.bf16.xpose.msra.mxu0 0
      %361 = vmatpush.bf16.xpose.msra.mxu0 0
      %362 = vmatpush.bf16.xpose.msra.mxu0 0
      %363 = vmatpush.bf16.xpose.msra.mxu0 0
      %364 = vmatpush.bf16.xpose.msra.mxu0 0
      %365 = vmatpush.bf16.xpose.msra.mxu0 0
      %366 = vmatpush.bf16.xpose.msra.mxu0 0
      %367 = vmatpush.bf16.xpose.msra.mxu0 %v358
      %368 = vmatmul.bf16.gmra.mxu0 %v355
      %v369 = vpop.f32.mrf.mxu0
      %v370 = vadd.f32 %v353, %v369
      %v371 = vpop.f32.mrf.mxu0
      %372 = vdwg.mxu0
      %v373 = vxor.u32 %v370, 2147483648
      %v374 = vmul.f32 %v373, 1.442695
      %v375 = vpow.pop %v374
      %v376 = vadd.f32 %v375, 1.0
      %v377 = vrcp.pop %v376
      %v378 = vmul.f32 %v376, %v377
      %v379 = vsub.f32 1.0, %v378
      %v380 = vmul.f32 %v377, %v379
      %v381 = vadd.f32 %v377, %v380
      %vm382 = vweird.f32 %v376
      %vm383 = vweird.f32 %v377
      %vm384 = vmor %vm382, %vm383
      %v385 = vsel %vm384, %v377, %v381
      %v386 = vand.u32 2147483647, %v376
      %vm387 = vcmp.eq.f32.partialorder %v386, 8.507059e+37
      %v388 = vand.u32 %v376, 2147483648
      %v389 = vor.u32 1.1754944e-38, %v388
      %v390 = vsel %vm387, %v389, %v385
      %v391 = vmul.f32 1.0, %v390
      %vm392 = vcmask 57344
      %393 = vst.msk [vmem:[%s273] sm:$0x1] %vm392, %v391
      %p394 = scmp.lt.s32.totalorder %s20, 1
      %s395 = scalar_select %p394, %s20, 1
      %s396 = scalar_lea.vmem %s7, %s395
      // Predicated region
      $region49: #{discriminator_forward.1} parent=47 // pred_check
        %p397 = pneg %p190
      $region50: #{discriminator_forward.1} parent=47 // pred_check_branch
        %399 = sbr.rel (%p397) target = $region52
      $region51: #{discriminator_forward.1} parent=47 // pred_region
        _
      $region52: #{discriminator_forward.1} parent=47 // pred_fallthru
        _
    $region48: #{discriminator_forward.1} parent=5 // pred_fallthru
      _
    %p400 = scmp.le.s32.totalorder 2, %s15
    // Predicated region
    $region53: #{discriminator_forward.1} parent=5 // pred_check
      %p401 = pneg %p400
    $region54: #{discriminator_forward.1} parent=5 // pred_check_branch
      %403 = sbr.rel (%p401) target = $region56
    $region55: #{discriminator_forward.1} parent=5 // pred_region
      %s404 = ssub.s32 %s15, 2
      // Predicated region
      $region57: #{discriminator_forward.1} parent=55 // pred_check
        %p405 = pneg %p196
      $region58: #{discriminator_forward.1} parent=55 // pred_check_branch
        %407 = sbr.rel (%p405) target = $region60
      $region59: #{discriminator_forward.1} parent=55 // pred_region
        %p408 = scmp.lt.s32.totalorder %s21, 1
        %s409 = scalar_select %p408, %s21, 1
        %s410 = scalar_lea.vmem %s7, %s409
      $region60: #{discriminator_forward.1} parent=55 // pred_fallthru
        _
    $region56: #{discriminator_forward.1} parent=5 // pred_fallthru
      _
  $region6: #{discriminator_forward.1} parent=0 // loop_footer
    %s19 = sadd.s32 1, %s15
  $region7: #{discriminator_forward.1} parent=0 // loop_footer_branch
    %14 = sbr.rel target = $region3
  $region8: #{discriminator_forward.1} parent=0 // loop_exit
    _

</llo_original>
